<compile_context>
chip_gen: v7x
topology: tpu7x:2x2x1
jax: 0.10.0
libtpu: 0.0.40
codegen_flags: <defaults>
</compile_context>

<pallas_src>
import functools

import jax
import jax.numpy as jnp
from jax.experimental import pallas as pl
from jax.experimental.pallas import tpu as pltpu


def _round_up(x, m):
    return ((x + m - 1) // m) * m


def _chip_defaults():
    """Per-TPU-generation tile / VMEM-cap defaults (see perf review)."""
    kind = ""
    try:
        kind = jax.devices()[0].device_kind.lower()
    except Exception:
        pass
    if "v6" in kind:          # v6e: HBM-bound at tm=256 -> bigger M tiles
        return dict(tm=512, tf=512, vmem_limit_bytes=100 * 1024 * 1024)
    if "v7" in kind:          # v7x: only 64 MiB VMEM/TC -> smaller tf, lower cap
        return dict(tm=384, tf=256, vmem_limit_bytes=48 * 1024 * 1024)
    if "v5 lite" in kind or "v5e" in kind or "v5lite" in kind:
        return dict(tm=256, tf=512, vmem_limit_bytes=96 * 1024 * 1024)
    # Unknown chip: conservative VMEM cap.
    return dict(tm=256, tf=512, vmem_limit_bytes=48 * 1024 * 1024)


def _pick_tf(F_dim, tf):
    """Lane-dense tf (multiple of 128) that ideally divides F exactly."""
    tf = max(128, min(tf, _round_up(F_dim, 128)))
    tf = _round_up(tf, 128)
    if F_dim % 128 == 0:
        cand = tf
        while cand >= 128:
            if F_dim % cand == 0:
                return cand
            cand -= 128
    return tf


# --------------------------------------------------------------------------
# Kernel
# --------------------------------------------------------------------------
def _ffn_kernel(h_ref, w13_ref, w2_ref, gattn_ref, o_ref, x_sc, acc_sc,
                *, eps, tf):
    """One (tm, D) token tile x one tf-wide slice of the FFN hidden dim."""
    f = pl.program_id(1)

    # --- per-M-tile init: ffn_norm (gffn already folded into w13) ----------
    @pl.when(f == 0)
    def _():
        h = h_ref[...].astype(jnp.float32)
        ms = jnp.mean(h * h, axis=-1, keepdims=True)
        x_sc[...] = (h * jax.lax.rsqrt(ms + eps)).astype(x_sc.dtype)

    # --- one fused (tm, D) x (D, 2*tf) MXU matmul: [ w1-tile | w3-tile ] ---
    ab = jnp.dot(x_sc[...], w13_ref[...], preferred_element_type=jnp.float32)
    a = ab[:, :tf]
    b = ab[:, tf:]
    gated = (a * jax.nn.sigmoid(a)) * b                      # silu(a) * b, f32

    # --- partial w2 contraction into the f32 accumulator -------------------
    partial = jnp.dot(gated.astype(w2_ref.dtype), w2_ref[...],
                      preferred_element_type=jnp.float32)

    @pl.when(f == 0)
    def _():
        acc_sc[...] = partial          # write-through: no zero-init + RMW

    @pl.when(f > 0)
    def _():
        acc_sc[...] += partial

    # --- finalize: residual add + attn_norm --------------------------------
    @pl.when(f == pl.num_programs(1) - 1)
    def _():
        r = h_ref[...].astype(jnp.float32) + acc_sc[...]
        ms2 = jnp.mean(r * r, axis=-1, keepdims=True)
        out = r * jax.lax.rsqrt(ms2 + eps) * gattn_ref[...].astype(jnp.float32)
        o_ref[...] = out.astype(o_ref.dtype)


# --------------------------------------------------------------------------
# One-time weight preparation (hoisted out of the per-call path)
# --------------------------------------------------------------------------
def prepare_ffn_weights(w1, w3, w2, gffn, *, tf, compute_dtype=jnp.bfloat16):
    """Fold the ffn_norm gain into w1/w3, transpose to (in, out), zero-pad the
    FFN hidden dim to a multiple of `tf`, and pre-block per F-tile so each
    grid step reads one fully contiguous HBM block.

    Returns:
      w13 : (nf, D, 2*tf)   block f = [ w1 tile f | w3 tile f ]
      w2b : (nf, tf, D)
    Call this ONCE per model; re-use the result across forward calls.
    """
    F_dim, D = w1.shape
    F_pad = _round_up(F_dim, tf)
    nf = F_pad // tf

    g = jnp.asarray(gffn, jnp.float32).reshape(1, D)
    w1t = (jnp.asarray(w1, jnp.float32) * g).T               # (D, F)
    w3t = (jnp.asarray(w3, jnp.float32) * g).T               # (D, F)
    w2t = jnp.asarray(w2, jnp.float32).T                     # (F, D)

    w1p = jnp.pad(w1t, ((0, 0), (0, F_pad - F_dim)))
    w3p = jnp.pad(w3t, ((0, 0), (0, F_pad - F_dim)))
    w2p = jnp.pad(w2t, ((0, F_pad - F_dim), (0, 0)))

    w13 = jnp.concatenate([w1p.reshape(D, nf, tf),
                           w3p.reshape(D, nf, tf)], axis=2)   # (D, nf, 2*tf)
    w13 = jnp.transpose(w13, (1, 0, 2)).astype(compute_dtype)  # (nf, D, 2*tf)
    w2b = w2p.reshape(nf, tf, D).astype(compute_dtype)         # (nf, tf, D)
    return w13, w2b


# --------------------------------------------------------------------------
# Hot entry point: uses pre-prepared weights
# --------------------------------------------------------------------------
def norm_ffn_residual_norm_prepared(h, w13, w2b, gattn, *, eps=1e-5,
                                    tm=None, vmem_limit_bytes=None):
    """h: (B, S, D); w13: (nf, D, 2*tf); w2b: (nf, tf, D); gattn: (D,)."""
    B, S, D = h.shape
    nf, _, two_tf = w13.shape
    tf = two_tf // 2
    M = B * S

    defaults = _chip_defaults()
    if tm is None:
        tm = defaults["tm"]
    if vmem_limit_bytes is None:
        vmem_limit_bytes = defaults["vmem_limit_bytes"]

    tm = min(tm, _round_up(M, 8))
    # Megacore: guarantee >= 2 tiles on the parallel M axis whenever possible,
    # otherwise one TensorCore sits idle on small / decode-sized batches.
    if M > 8 and _round_up(M, tm) // tm < 2:
        tm = max(8, _round_up((M + 1) // 2, 8))
    M_pad = _round_up(M, tm)

    h2 = h.reshape(M, D)
    if M_pad != M:
        h2 = jnp.pad(h2, ((0, M_pad - M), (0, 0)))   # zero rows are harmless

    gattn_f = jnp.asarray(gattn, jnp.float32).reshape(1, D)
    compute_dtype = w13.dtype

    kernel = functools.partial(_ffn_kernel, eps=eps, tf=tf)

    out = pl.pallas_call(
        kernel,
        out_shape=jax.ShapeDtypeStruct((M_pad, D), h.dtype),
        grid_spec=pltpu.PrefetchScalarGridSpec(
            num_scalar_prefetch=0,
            grid=(M_pad // tm, nf),
            in_specs=[
                pl.BlockSpec((tm, D), lambda i, f: (i, 0)),            # h tile
                pl.BlockSpec((pl.Squeezed(), D, 2 * tf),
                             lambda i, f: (f, 0, 0)),                  # [w1|w3]
                pl.BlockSpec((pl.Squeezed(), tf, D),
                             lambda i, f: (f, 0, 0)),                  # w2 tile
                pl.BlockSpec((1, D), lambda i, f: (0, 0)),             # attn_norm
            ],
            out_specs=pl.BlockSpec((tm, D), lambda i, f: (i, 0)),
            scratch_shapes=[
                pltpu.VMEM((tm, D), compute_dtype),   # cached normalized acts
                pltpu.VMEM((tm, D), jnp.float32),     # f32 output accumulator
            ],
        ),
        compiler_params=pltpu.CompilerParams(
            dimension_semantics=("parallel", "arbitrary"),
            vmem_limit_bytes=vmem_limit_bytes,
        ),
    )(h2, w13, w2b, gattn_f)

    if M_pad != M:
        out = out[:M]
    return out.reshape(B, S, D)


def norm_ffn_residual_norm(h, w1, w3, w2, gffn, gattn, *, eps=1e-5,
                           tm=None, tf=None, compute_dtype=jnp.bfloat16,
                           vmem_limit_bytes=None):
    """Convenience one-shot entry point (re-prepares weights every call).
    For repeated calls, use prepare_ffn_weights() once and then
    norm_ffn_residual_norm_prepared()."""
    F_dim = w1.shape[0]
    if tf is None:
        tf = _chip_defaults()["tf"]
    tf = _pick_tf(F_dim, tf)
    w13, w2b = prepare_ffn_weights(w1, w3, w2, gffn, tf=tf,
                                   compute_dtype=compute_dtype)
    return norm_ffn_residual_norm_prepared(h, w13, w2b, gattn, eps=eps, tm=tm,
                                           vmem_limit_bytes=vmem_limit_bytes)


# --------------------------------------------------------------------------
# References & test
# --------------------------------------------------------------------------
def _llama_intermediate_size(dim, hidden_dim, multiple_of, ffn_dim_multiplier):
    # Mirrors the torchao/llama FeedForward hidden-dim computation.
    hidden_dim = int(2 * hidden_dim / 3)
    if ffn_dim_multiplier is not None:
        hidden_dim = int(ffn_dim_multiplier * hidden_dim)
    hidden_dim = multiple_of * ((hidden_dim + multiple_of - 1) // multiple_of)
    return hidden_dim


def _reference_f32(h, w1, w3, w2, gffn, gattn, eps=1e-5):
    """Pure-f32 reference (matches the torch module with f32 inputs)."""
    def rmsnorm(x, g):
        xf = x.astype(jnp.float32)
        n = xf * jax.lax.rsqrt(jnp.mean(xf * xf, axis=-1, keepdims=True) + eps)
        return n.astype(x.dtype) * g

    B, S, D = h.shape
    h2 = h.reshape(B * S, D)
    x = rmsnorm(h2, gffn)
    a = x @ w1.T
    b = x @ w3.T
    y = (jax.nn.silu(a) * b) @ w2.T
    r = h2 + y
    return rmsnorm(r, gattn).reshape(B, S, D)


def _reference_matched(h, w1, w3, w2, gffn, gattn, eps=1e-5,
                       compute_dtype=jnp.bfloat16):
    """Reference using the same bf16-operand / f32-accumulate matmuls."""
    B, S, D = h.shape
    hf = h.reshape(B * S, D).astype(jnp.float32)
    ms = jnp.mean(hf * hf, axis=-1, keepdims=True)
    x = (hf * jax.lax.rsqrt(ms + eps)) * gffn
    xc = x.astype(compute_dtype)
    a = jnp.dot(xc, w1.T.astype(compute_dtype), preferred_element_type=jnp.float32)
    b = jnp.dot(xc, w3.T.astype(compute_dtype), preferred_element_type=jnp.float32)
    gated = (a * jax.nn.sigmoid(a)) * b
    y = jnp.dot(gated.astype(compute_dtype), w2.T.astype(compute_dtype),
                preferred_element_type=jnp.float32)
    r = hf + y
    ms2 = jnp.mean(r * r, axis=-1, keepdims=True)
    out = r * jax.lax.rsqrt(ms2 + eps) * gattn
    return out.astype(h.dtype).reshape(B, S, D)


if __name__ == "__main__":
    B, S, dim = 2, 8, 128
    hidden_dim, multiple_of, ffn_dim_multiplier = 256, 32, None
    F_dim = _llama_intermediate_size(dim, hidden_dim, multiple_of,
                                     ffn_dim_multiplier)  # -> 192

    key = jax.random.PRNGKey(0)
    k_h, k1, k2, k3 = jax.random.split(key, 4)
    h = jax.random.normal(k_h, (B, S, dim), dtype=jnp.float32)
    # Linear weights in torch layout (out_features, in_features).
    w1 = jax.random.normal(k1, (F_dim, dim), dtype=jnp.float32) * 0.02
    w3 = jax.random.normal(k2, (F_dim, dim), dtype=jnp.float32) * 0.02
    w2 = jax.random.normal(k3, (dim, F_dim), dtype=jnp.float32) * 0.02
    gffn = jnp.ones((dim,), dtype=jnp.float32)    # RMSNorm weights init to ones
    gattn = jnp.ones((dim,), dtype=jnp.float32)

    # tf=128 at this toy F (192 -> padded 256) exercises the F-streaming /
    # accumulator path (nf = 2).
    tf = 128

    # One-time weight preparation (hoisted out of the hot path).
    w13, w2b = prepare_ffn_weights(w1, w3, w2, gffn, tf=tf)
    w13, w2b = jax.block_until_ready((w13, w2b))

    out = norm_ffn_residual_norm_prepared(h, w13, w2b, gattn)
    out = jax.block_until_ready(out)
    assert out.shape == (B, S, dim)

    # Matched-precision reference (same bf16 MXU operands, f32 accumulation).
    ref_m = _reference_matched(h, w1, w3, w2, gffn, gattn)
    assert jnp.allclose(out, ref_m, atol=5e-3, rtol=5e-3), \
        "mismatch vs matched-precision reference"

    # Loose sanity check vs the full-f32 torch-equivalent reference
    # (differences are only bf16 matmul rounding).
    ref_f = _reference_f32(h, w1, w3, w2, gffn, gattn)
    assert jnp.allclose(out, ref_f, atol=5e-2, rtol=5e-2), \
        "mismatch vs f32 reference"

    # One-shot convenience path must agree with the prepared path.
    out2 = norm_ffn_residual_norm(h, w1, w3, w2, gffn, gattn, tf=tf)
    out2 = jax.block_until_ready(out2)
    assert jnp.allclose(out, out2, atol=1e-6, rtol=1e-6), \
        "prepared vs one-shot path mismatch"

    print("KERNEL_OK")
</pallas_src>

<mosaic_0001>
module attributes {stable_mosaic.version = 11 : i64} {
  func.func @_ffn_kernel(%arg0: i32, %arg1: i32, %arg2: memref<8x128xf32, #tpu.memory_space<vmem>>, %arg3: memref<1x128x256xbf16, #tpu.memory_space<vmem>>, %arg4: memref<1x128x128xbf16, #tpu.memory_space<vmem>>, %arg5: memref<1x128xf32, #tpu.memory_space<vmem>>, %arg6: memref<8x128xf32, #tpu.memory_space<vmem>>, %arg7: memref<8x128xbf16, #tpu.memory_space<vmem>>, %arg8: memref<8x128xf32, #tpu.memory_space<vmem>>) attributes {dimension_semantics = [#tpu.dimension_semantics<parallel>, #tpu.dimension_semantics<arbitrary>], iteration_bounds = array<i64: 2, 2>, scalar_prefetch = 0 : i64, scratch_operands = 2 : i64, tpu.core_type = #tpu.core_type<tc>, window_params = [{transform_indices = @transform_0, window_bounds = array<i64: 8, 128>}, {transform_indices = @transform_1, window_bounds = array<i64: 1, 128, 256>}, {transform_indices = @transform_2, window_bounds = array<i64: 1, 128, 128>}, {pipeline_mode = #tpu.pipeline_mode<synchronous>, transform_indices = @transform_3, window_bounds = array<i64: 1, 128>}, {transform_indices = @transform_4, window_bounds = array<i64: 8, 128>}]} {
    %c0_i32 = arith.constant 0 : i32
    %0 = arith.cmpi eq, %arg1, %c0_i32 : i32
    %1 = arith.extui %0 : i1 to i32
    %c0_i32_0 = arith.constant 0 : i32
    %2 = arith.cmpi ne, %1, %c0_i32_0 : i32
    scf.if %2 {
      %c0_15 = arith.constant 0 : index
      %c0_16 = arith.constant 0 : index
      %29 = vector.load %arg2[%c0_15, %c0_16] : memref<8x128xf32, #tpu.memory_space<vmem>>, vector<8x128xf32>
      %30 = arith.mulf %29, %29 : vector<8x128xf32>
      %cst_17 = arith.constant dense<0.000000e+00> : vector<8xf32>
      %31 = vector.multi_reduction <add>, %30, %cst_17 [1] : vector<8x128xf32> to vector<8xf32>
      %32 = vector.shape_cast %31 : vector<8xf32> to vector<8x1xf32>
      %cst_18 = arith.constant 1.280000e+02 : f32
      %33 = vector.broadcast %cst_18 : f32 to vector<8x1xf32>
      %34 = arith.divf %32, %33 : vector<8x1xf32>
      %cst_19 = arith.constant 9.99999974E-6 : f32
      %35 = vector.broadcast %cst_19 : f32 to vector<8x1xf32>
      %36 = arith.addf %34, %35 : vector<8x1xf32>
      %37 = math.rsqrt %36 : vector<8x1xf32>
      %38 = vector.broadcast %37 : vector<8x1xf32> to vector<8x128xf32>
      %39 = arith.mulf %29, %38 : vector<8x128xf32>
      %40 = arith.truncf %39 : vector<8x128xf32> to vector<8x128xbf16>
      %c0_20 = arith.constant 0 : index
      %c0_21 = arith.constant 0 : index
      %41 = vector.load %arg7[%c0_20, %c0_21] : memref<8x128xbf16, #tpu.memory_space<vmem>>, vector<8x128xbf16>
      tpu.vector_store %arg7[%c0_20, %c0_21], %40 {strides = array<i32>} : memref<8x128xbf16, #tpu.memory_space<vmem>>, vector<8x128xbf16>,
    } else {
    }
    %c0 = arith.constant 0 : index
    %c0_1 = arith.constant 0 : index
    %3 = vector.load %arg7[%c0, %c0_1] : memref<8x128xbf16, #tpu.memory_space<vmem>>, vector<8x128xbf16>
    %c0_2 = arith.constant 0 : index
    %c0_3 = arith.constant 0 : index
    %c0_4 = arith.constant 0 : index
    %4 = vector.load %arg3[%c0_2, %c0_3, %c0_4] : memref<1x128x256xbf16, #tpu.memory_space<vmem>>, vector<1x128x256xbf16>
    %5 = vector.shape_cast %4 : vector<1x128x256xbf16> to vector<128x256xbf16>
    %cst = arith.constant dense<0.000000e+00> : vector<8x256xf32>
    %6 = tpu.matmul %3, %5, %cst {dimension_numbers = #tpu.dot_dimension_numbers<[1], [0], [0], [1], [0, 0, 1, 1], [], []>} : vector<8x128xbf16>, vector<128x256xbf16>, vector<8x256xf32> -> vector<8x256xf32>
    %7 = vector.extract_strided_slice %6 {offsets = [0, 0], sizes = [8, 128], strides = [1, 1]} : vector<8x256xf32> to vector<8x128xf32>
    %8 = vector.extract_strided_slice %6 {offsets = [0, 128], sizes = [8, 128], strides = [1, 1]} : vector<8x256xf32> to vector<8x128xf32>
    %9 = arith.negf %7 : vector<8x128xf32>
    %10 = math.exp %9 : vector<8x128xf32>
    %cst_5 = arith.constant 1.000000e+00 : f32
    %11 = vector.broadcast %cst_5 : f32 to vector<8x128xf32>
    %12 = arith.addf %11, %10 : vector<8x128xf32>
    %13 = arith.divf %11, %12 : vector<8x128xf32>
    %14 = arith.mulf %7, %13 : vector<8x128xf32>
    %15 = arith.mulf %14, %8 : vector<8x128xf32>
    %16 = arith.truncf %15 : vector<8x128xf32> to vector<8x128xbf16>
    %c0_6 = arith.constant 0 : index
    %c0_7 = arith.constant 0 : index
    %c0_8 = arith.constant 0 : index
    %17 = vector.load %arg4[%c0_6, %c0_7, %c0_8] : memref<1x128x128xbf16, #tpu.memory_space<vmem>>, vector<1x128x128xbf16>
    %18 = vector.shape_cast %17 : vector<1x128x128xbf16> to vector<128x128xbf16>
    %cst_9 = arith.constant dense<0.000000e+00> : vector<8x128xf32>
    %19 = tpu.matmul %16, %18, %cst_9 {dimension_numbers = #tpu.dot_dimension_numbers<[1], [0], [0], [1], [0, 0, 1, 1], [], []>} : vector<8x128xbf16>, vector<128x128xbf16>, vector<8x128xf32> -> vector<8x128xf32>
    %c0_i32_10 = arith.constant 0 : i32
    %20 = arith.cmpi eq, %arg1, %c0_i32_10 : i32
    %21 = arith.extui %20 : i1 to i32
    %c0_i32_11 = arith.constant 0 : i32
    %22 = arith.cmpi ne, %21, %c0_i32_11 : i32
    scf.if %22 {
      %c0_15 = arith.constant 0 : index
      %c0_16 = arith.constant 0 : index
      %29 = vector.load %arg8[%c0_15, %c0_16] : memref<8x128xf32, #tpu.memory_space<vmem>>, vector<8x128xf32>
      tpu.vector_store %arg8[%c0_15, %c0_16], %19 {strides = array<i32>} : memref<8x128xf32, #tpu.memory_space<vmem>>, vector<8x128xf32>,
    } else {
    }
    %c0_i32_12 = arith.constant 0 : i32
    %23 = arith.cmpi sgt, %arg1, %c0_i32_12 : i32
    %24 = arith.extui %23 : i1 to i32
    %c0_i32_13 = arith.constant 0 : i32
    %25 = arith.cmpi ne, %24, %c0_i32_13 : i32
    scf.if %25 {
      %c0_15 = arith.constant 0 : index
      %c0_16 = arith.constant 0 : index
      %29 = vector.load %arg8[%c0_15, %c0_16] : memref<8x128xf32, #tpu.memory_space<vmem>>, vector<8x128xf32>
      %30 = arith.addf %29, %19 : vector<8x128xf32>
      %c0_17 = arith.constant 0 : index
      %c0_18 = arith.constant 0 : index
      %31 = vector.load %arg8[%c0_17, %c0_18] : memref<8x128xf32, #tpu.memory_space<vmem>>, vector<8x128xf32>
      tpu.vector_store %arg8[%c0_17, %c0_18], %30 {strides = array<i32>} : memref<8x128xf32, #tpu.memory_space<vmem>>, vector<8x128xf32>,
    } else {
    }
    %c1_i32 = arith.constant 1 : i32
    %26 = arith.cmpi eq, %arg1, %c1_i32 : i32
    %27 = arith.extui %26 : i1 to i32
    %c0_i32_14 = arith.constant 0 : i32
    %28 = arith.cmpi ne, %27, %c0_i32_14 : i32
    scf.if %28 {
      %c0_15 = arith.constant 0 : index
      %c0_16 = arith.constant 0 : index
      %29 = vector.load %arg2[%c0_15, %c0_16] : memref<8x128xf32, #tpu.memory_space<vmem>>, vector<8x128xf32>
      %c0_17 = arith.constant 0 : index
      %c0_18 = arith.constant 0 : index
      %30 = vector.load %arg8[%c0_17, %c0_18] : memref<8x128xf32, #tpu.memory_space<vmem>>, vector<8x128xf32>
      %31 = arith.addf %29, %30 : vector<8x128xf32>
      %32 = arith.mulf %31, %31 : vector<8x128xf32>
      %cst_19 = arith.constant dense<0.000000e+00> : vector<8xf32>
      %33 = vector.multi_reduction <add>, %32, %cst_19 [1] : vector<8x128xf32> to vector<8xf32>
      %34 = vector.shape_cast %33 : vector<8xf32> to vector<8x1xf32>
      %cst_20 = arith.constant 1.280000e+02 : f32
      %35 = vector.broadcast %cst_20 : f32 to vector<8x1xf32>
      %36 = arith.divf %34, %35 : vector<8x1xf32>
      %cst_21 = arith.constant 9.99999974E-6 : f32
      %37 = vector.broadcast %cst_21 : f32 to vector<8x1xf32>
      %38 = arith.addf %36, %37 : vector<8x1xf32>
      %39 = math.rsqrt %38 : vector<8x1xf32>
      %40 = vector.broadcast %39 : vector<8x1xf32> to vector<8x128xf32>
      %41 = arith.mulf %31, %40 : vector<8x128xf32>
      %c0_22 = arith.constant 0 : index
      %c0_23 = arith.constant 0 : index
      %42 = vector.load %arg5[%c0_22, %c0_23] : memref<1x128xf32, #tpu.memory_space<vmem>>, vector<1x128xf32>
      %43 = vector.broadcast %42 : vector<1x128xf32> to vector<8x128xf32>
      %44 = arith.mulf %41, %43 : vector<8x128xf32>
      %c0_24 = arith.constant 0 : index
      %c0_25 = arith.constant 0 : index
      %45 = vector.load %arg6[%c0_24, %c0_25] : memref<8x128xf32, #tpu.memory_space<vmem>>, vector<8x128xf32>
      tpu.vector_store %arg6[%c0_24, %c0_25], %44 {strides = array<i32>} : memref<8x128xf32, #tpu.memory_space<vmem>>, vector<8x128xf32>,
    } else {
    }
    return
  }
  func.func @transform_0(%arg0: i32, %arg1: i32) -> (i32, i32) {
    %c0_i32 = arith.constant 0 : i32
    %c0_i32_0 = arith.constant 0 : i32
    return %arg0, %c0_i32 : i32, i32
  }
  func.func @transform_1(%arg0: i32, %arg1: i32) -> (i32, i32, i32) {
    %c0_i32 = arith.constant 0 : i32
    %c0_i32_0 = arith.constant 0 : i32
    %c0_i32_1 = arith.constant 0 : i32
    return %arg1, %c0_i32, %c0_i32_0 : i32, i32, i32
  }
  func.func @transform_2(%arg0: i32, %arg1: i32) -> (i32, i32, i32) {
    %c0_i32 = arith.constant 0 : i32
    %c0_i32_0 = arith.constant 0 : i32
    %c0_i32_1 = arith.constant 0 : i32
    return %arg1, %c0_i32, %c0_i32_0 : i32, i32, i32
  }
  func.func @transform_3(%arg0: i32, %arg1: i32) -> (i32, i32) {
    %c0_i32 = arith.constant 0 : i32
    %c0_i32_0 = arith.constant 0 : i32
    %c0_i32_1 = arith.constant 0 : i32
    return %c0_i32, %c0_i32_0 : i32, i32
  }
  func.func @transform_4(%arg0: i32, %arg1: i32) -> (i32, i32) {
    %c0_i32 = arith.constant 0 : i32
    %c0_i32_0 = arith.constant 0 : i32
    return %arg0, %c0_i32 : i32, i32
  }
}

</mosaic_0001>

<llo_original>
// kernel: tpu_custom_call.1
$region0: #{tpu_custom_call.1}
  #allocation0 [shape = 'u32[]', space=smem, size = 0x4, offset = 0x4, fixed_abs, tag = 'smem constant byte address 0x4 - core index']
  #allocation1 [shape = 'u32[144,128]{1,0:T(1,128)}', space=vmem, size = 0x12000, scoped, tag = 'internal scratch']
  #allocation2 [shape = 'bf16[8,128]{1,0:T(8,128)(2,1)}', space=vmem, size = 0x800, scoped, tag = 'scratch operand']
  #allocation3 [shape = 'f32[8,128]{1,0:T(8,128)}', space=vmem, size = 0x1000, scoped, tag = 'scratch operand']
  %s0 = inlined_call_operand.hbm [shape: f32[16,128], index: 0, kind: input, shape index: {}]
  %s1 = inlined_call_operand.hbm [shape: bf16[2,128,256], index: 1, kind: input, shape index: {}]
  %s2 = inlined_call_operand.hbm [shape: bf16[2,128,128], index: 2, kind: input, shape index: {}]
  %s3 = inlined_call_operand.vmem [shape: f32[1,128], index: 3, kind: input, shape index: {}]
  %s4 = inlined_call_operand.hbm [shape: f32[16,128], index: 4, kind: output, shape index: {}]
  %s5 = sld [smem:[#allocation0]]
  $region77: #{tpu_custom_call.1} parent=0
    _
  %s7 = ssub.s32 1, %s5
  %s8 = scalar_select 0, %s7, %s5
  $region1: #{tpu_custom_call.1} parent=0
    #allocation4 [shape = 'u8[8192]{0}', space=vmem, size = 0x2000, scoped, tag = 'input window, operand 0']
    #allocation5 [shape = 's32[2]{0}', space=sflag, size = 0x8, scoped, tag = 'scoped memory for tpu_custom_call.1']
    #allocation6 [shape = 's32[2]{0}', space=sflag, size = 0x8, scoped, tag = 'scoped memory for tpu_custom_call.1']
    #allocation7 [shape = 'u8[131072]{0}', space=vmem, size = 0x20000, scoped, tag = 'input window, operand 1']
    #allocation8 [shape = 's32[2]{0}', space=sflag, size = 0x8, scoped, tag = 'scoped memory for tpu_custom_call.1']
    #allocation9 [shape = 'u8[65536]{0}', space=vmem, size = 0x10000, scoped, tag = 'input window, operand 2']
    #allocation10 [shape = 'u8[8192]{0}', space=vmem, size = 0x2000, scoped, tag = 'output window, operand 0']
    %9 = vsyncpa [#allocation5], 0
    %s10 = scalar_lea.sflag [#allocation5], 1
    %11 = vsyncpa %s10, 0
    %12 = vsyncpa [#allocation8], 0
    %s13 = scalar_lea.sflag [#allocation8], 1
    %14 = vsyncpa %s13, 0
    %15 = vsyncpa [#allocation6], 0
    %s16 = scalar_lea.sflag [#allocation6], 1
    %17 = vsyncpa %s16, 0
    loop: start=0, step=1, limit=6
    $region2: #{tpu_custom_call.1} parent=1 // loop_pre_header
      _
    $region3: #{tpu_custom_call.1} parent=1 // loop_header
      %s19 = sphi 0, %s23
      %p20 = scmp.ge.s32.totalorder %s19, 6
      %s26 = sphi 0, %s38
      %s27 = sphi 0, %s34
      %s28 = sphi 0, %s26
      %s29 = sphi 0, %s27
      %s30 = sphi 0, %s28
      %s31 = sphi 0, %s29
      %s41 = sphi 0, %s43
      %s44 = sphi 0, %s41
      %s45 = sphi 0, %s44
      %s61 = sphi 0, %s45
      %s67 = sphi 0, %s69
      %s70 = sphi 0, %s67
      %s71 = sphi 0, %s70
      %s87 = sphi 0, %s71
      %s93 = sphi 0, %s95
      %s96 = sphi 0, %s93
      %s97 = sphi 0, %s96
      %s113 = sphi 0, %s97
      %s117 = sphi 0, %s117
      %s119 = sphi 0, %s117
      %s120 = sphi 0, %s119
      %s134 = sphi 0, %s120
      %s140 = sphi 0, %s142
      %s143 = sphi 0, %s140
      %s144 = sphi 0, %s143
      %s160 = sphi 0, %s144
    $region4: #{tpu_custom_call.1} parent=1 // loop_header_branch
      %22 = sbr.rel (%p20) target = $region8
    $region5: #{tpu_custom_call.1} parent=1 // loop_body
      %s24 = ssub.s32 %s19, 1
      %s25 = ssub.s32 %s19, 2
      %s32 = sadd.s32 1, %s27
      %p33 = scmp.ge.s32.totalorder %s32, 2
      %s34 = scalar_select %p33, 0, %s32
      %s35 = sadd.s32 1, %s26
      %s36 = scalar_select %p33, %s35, %s26
      %p37 = scmp.ge.s32.totalorder %s36, 2
      %s38 = scalar_select %p37, 0, %s36
      %s39 = ssub.s32 %s26, %s38
      %p40 = scmp.eq.s32.totalorder %s39, 0
      %s42 = sadd.s32 %s41, 1
      %s43 = scalar_select %p40, %s41, %s42
      %p46 = pneg %p40
      %p47 = scmp.eq.s32.totalorder %s19, 3
      %p48 = por %p46, %p47
      %p49 = scmp.ne.s32.totalorder %s41, %s44
      %p50 = scmp.eq.s32.totalorder %s19, 0
      %p51 = por %p49, %p50
      %p52 = scmp.ne.s32.totalorder %s41, %s44
      %p53 = scmp.eq.s32.totalorder %s24, 3
      %p54 = por %p52, %p53
      %p55 = scmp.ne.s32.totalorder %s44, %s45
      %p56 = scmp.eq.s32.totalorder %s24, 0
      %p57 = por %p55, %p56
      %p58 = scmp.ne.s32.totalorder %s44, %s45
      %p59 = scmp.eq.s32.totalorder %s25, 3
      %p60 = por %p58, %p59
      %p62 = scmp.ne.s32.totalorder %s45, %s61
      %p63 = scmp.eq.s32.totalorder %s25, 0
      %p64 = por %p62, %p63
      %s65 = ssub.s32 %s27, %s34
      %p66 = scmp.eq.s32.totalorder %s65, 0
      %s68 = sadd.s32 %s67, 1
      %s69 = scalar_select %p66, %s67, %s68
      %p72 = pneg %p66
      %p73 = scmp.eq.s32.totalorder %s19, 3
      %p74 = por %p72, %p73
      %p75 = scmp.ne.s32.totalorder %s67, %s70
      %p76 = scmp.eq.s32.totalorder %s19, 0
      %p77 = por %p75, %p76
      %p78 = scmp.ne.s32.totalorder %s67, %s70
      %p79 = scmp.eq.s32.totalorder %s24, 3
      %p80 = por %p78, %p79
      %p81 = scmp.ne.s32.totalorder %s70, %s71
      %p82 = scmp.eq.s32.totalorder %s24, 0
      %p83 = por %p81, %p82
      %p84 = scmp.ne.s32.totalorder %s70, %s71
      %p85 = scmp.eq.s32.totalorder %s25, 3
      %p86 = por %p84, %p85
      %p88 = scmp.ne.s32.totalorder %s71, %s87
      %p89 = scmp.eq.s32.totalorder %s25, 0
      %p90 = por %p88, %p89
      %s91 = ssub.s32 %s27, %s34
      %p92 = scmp.eq.s32.totalorder %s91, 0
      %s94 = sadd.s32 %s93, 1
      %s95 = scalar_select %p92, %s93, %s94
      %p98 = pneg %p92
      %p99 = scmp.eq.s32.totalorder %s19, 3
      %p100 = por %p98, %p99
      %p101 = scmp.ne.s32.totalorder %s93, %s96
      %p102 = scmp.eq.s32.totalorder %s19, 0
      %p103 = por %p101, %p102
      %p104 = scmp.ne.s32.totalorder %s93, %s96
      %p105 = scmp.eq.s32.totalorder %s24, 3
      %p106 = por %p104, %p105
      %p107 = scmp.ne.s32.totalorder %s96, %s97
      %p108 = scmp.eq.s32.totalorder %s24, 0
      %p109 = por %p107, %p108
      %p110 = scmp.ne.s32.totalorder %s96, %s97
      %p111 = scmp.eq.s32.totalorder %s25, 3
      %p112 = por %p110, %p111
      %p114 = scmp.ne.s32.totalorder %s97, %s113
      %p115 = scmp.eq.s32.totalorder %s25, 0
      %p116 = por %p114, %p115
      %s118 = sadd.s32 %s117, 1
      %p121 = scmp.eq.s32.totalorder %s19, 3
      %p122 = scmp.ne.s32.totalorder %s117, %s119
      %p123 = scmp.eq.s32.totalorder %s19, 0
      %p124 = por %p122, %p123
      %p125 = scmp.ne.s32.totalorder %s117, %s119
      %p126 = scmp.eq.s32.totalorder %s24, 3
      %p127 = por %p125, %p126
      %p128 = scmp.ne.s32.totalorder %s119, %s120
      %p129 = scmp.eq.s32.totalorder %s24, 0
      %p130 = por %p128, %p129
      %p131 = scmp.ne.s32.totalorder %s119, %s120
      %p132 = scmp.eq.s32.totalorder %s25, 3
      %p133 = por %p131, %p132
      %p135 = scmp.ne.s32.totalorder %s120, %s134
      %p136 = scmp.eq.s32.totalorder %s25, 0
      %p137 = por %p135, %p136
      %s138 = ssub.s32 %s26, %s38
      %p139 = scmp.eq.s32.totalorder %s138, 0
      %s141 = sadd.s32 %s140, 1
      %s142 = scalar_select %p139, %s140, %s141
      %p145 = pneg %p139
      %p146 = scmp.eq.s32.totalorder %s19, 3
      %p147 = por %p145, %p146
      %p148 = scmp.ne.s32.totalorder %s140, %s143
      %p149 = scmp.eq.s32.totalorder %s19, 0
      %p150 = por %p148, %p149
      %p151 = scmp.ne.s32.totalorder %s140, %s143
      %p152 = scmp.eq.s32.totalorder %s24, 3
      %p153 = por %p151, %p152
      %p154 = scmp.ne.s32.totalorder %s143, %s144
      %p155 = scmp.eq.s32.totalorder %s24, 0
      %p156 = por %p154, %p155
      %p157 = scmp.ne.s32.totalorder %s143, %s144
      %p158 = scmp.eq.s32.totalorder %s25, 3
      %p159 = por %p157, %p158
      %p161 = scmp.ne.s32.totalorder %s144, %s160
      %p162 = scmp.eq.s32.totalorder %s25, 0
      %p163 = por %p161, %p162
      %p164 = scmp.le.s32.totalorder 1, %s19
      %p165 = scmp.lt.s32.totalorder %s19, 5
      %p166 = pnand %p164, %p165
      %p167 = pneg %p166
      // Predicated region
      $region9: #{tpu_custom_call.1} parent=5 // pred_check
        _
      $region10: #{tpu_custom_call.1} parent=5 // pred_check_branch
        %169 = sbr.rel (%p166) target = $region12
      $region11: #{tpu_custom_call.1} parent=5 // pred_region
        %s170 = ssub.s32 %s19, 1
        // Predicated region
        $region13: #{tpu_custom_call.1} parent=11 // pred_check
          %p171 = pneg %p130
        $region14: #{tpu_custom_call.1} parent=11 // pred_check_branch
          %173 = sbr.rel (%p171) target = $region16
        $region15: #{tpu_custom_call.1} parent=11 // pred_region
          _
        $region16: #{tpu_custom_call.1} parent=11 // pred_fallthru
          _
      $region12: #{tpu_custom_call.1} parent=5 // pred_fallthru
        _
      %p174 = scmp.lt.s32.totalorder %s19, 4
      // Predicated region
      $region17: #{tpu_custom_call.1} parent=5 // pred_check
        %p175 = pneg %p174
      $region18: #{tpu_custom_call.1} parent=5 // pred_check_branch
        %177 = sbr.rel (%p175) target = $region20
      $region19: #{tpu_custom_call.1} parent=5 // pred_region
        // Predicated region
        $region21: #{tpu_custom_call.1} parent=19 // pred_check
          %p178 = pneg %p51
        $region22: #{tpu_custom_call.1} parent=19 // pred_check_branch
          %180 = sbr.rel (%p178) target = $region24
        $region23: #{tpu_custom_call.1} parent=19 // pred_region
          %s181 = sand.u32 %s41, 1
          %s182 = scalar_lea.sflag [#allocation5], %s181
          %s183 = sand.u32 %s41, 1
          %s184 = smul.addr %s183, 8
          %s185 = scalar_lea.vmem [#allocation4], %s184
          %s187 = ssub.s32 128, 128
          %188 = vsyncadd %s182, %s187
          %s189 = smul.addr %s26, 128
          %s190 = scalar_lea.hbm %s0, %s189
          %s192 = sshll.u32 %s185, 4
          %s193 = int_to_ptr.vmem [resolvable:$true] %s192
          %195 = dma.hbm_to_vmem [thread:$0]  %s190, 128, %s193, %s182
        $region24: #{tpu_custom_call.1} parent=19 // pred_fallthru
          _
        // Predicated region
        $region25: #{tpu_custom_call.1} parent=19 // pred_check
          %p196 = pneg %p77
        $region26: #{tpu_custom_call.1} parent=19 // pred_check_branch
          %198 = sbr.rel (%p196) target = $region28
        $region27: #{tpu_custom_call.1} parent=19 // pred_region
          %s199 = sand.u32 %s19, 1
          %s200 = scalar_lea.sflag [#allocation8], %s199
          %s201 = sand.u32 %s67, 1
          %s202 = smul.addr %s201, 128
          %s203 = scalar_lea.vmem [#allocation7], %s202
          %s205 = ssub.s32 2048, 2048
          %206 = vsyncadd %s200, %s205
          %s207 = smul.addr %s27, 32
          %s208 = smul.addr %s207, 64
          %s209 = scalar_lea.hbm %s1, %s208
          %s210 = sshll.u32 %s203, 4
          %s211 = int_to_ptr.vmem [resolvable:$true] %s210
          %216 = dma.hbm_to_vmem [thread:$0]  %s209, 2048, %s211, %s200, 128, 128, 8
        $region28: #{tpu_custom_call.1} parent=19 // pred_fallthru
          _
        // Predicated region
        $region29: #{tpu_custom_call.1} parent=19 // pred_check
          %p217 = pneg %p103
        $region30: #{tpu_custom_call.1} parent=19 // pred_check_branch
          %219 = sbr.rel (%p217) target = $region32
        $region31: #{tpu_custom_call.1} parent=19 // pred_region
          %s220 = sand.u32 %s19, 1
          %s221 = scalar_lea.sflag [#allocation8], %s220
          %s222 = sand.u32 %s93, 1
          %s223 = smul.addr %s222, 64
          %s224 = scalar_lea.vmem [#allocation9], %s223
          %s226 = ssub.s32 1024, 1024
          %227 = vsyncadd %s221, %s226
          %s228 = smul.addr %s27, 16
          %s229 = smul.addr %s228, 64
          %s230 = scalar_lea.hbm %s2, %s229
          %s231 = sshll.u32 %s224, 4
          %s232 = int_to_ptr.vmem [resolvable:$true] %s231
          %237 = dma.hbm_to_vmem [thread:$0]  %s230, 1024, %s232, %s221, 64, 64, 4
        $region32: #{tpu_custom_call.1} parent=19 // pred_fallthru
          _
      $region20: #{tpu_custom_call.1} parent=5 // pred_fallthru
        _
      %p238 = scmp.le.s32.totalorder 1, %s19
      %p239 = scmp.lt.s32.totalorder %s19, 5
      %p240 = pnand %p238, %p239
      %p241 = pneg %p240
      // Predicated region
      $region33: #{tpu_custom_call.1} parent=5 // pred_check
        _
      $region34: #{tpu_custom_call.1} parent=5 // pred_check_branch
        %243 = sbr.rel (%p240) target = $region36
      $region35: #{tpu_custom_call.1} parent=5 // pred_region
        %s244 = ssub.s32 %s19, 1
        %s245 = sand.u32 %s44, 1
        %s246 = scalar_lea.sflag [#allocation5], %s245
        %s247 = sand.u32 %s44, 1
        %s248 = smul.addr %s247, 8
        %s249 = scalar_lea.vmem [#allocation4], %s248
        // Predicated region
        $region37: #{tpu_custom_call.1} parent=35 // pred_check
          %p250 = pneg %p57
        $region38: #{tpu_custom_call.1} parent=35 // pred_check_branch
          %252 = sbr.rel (%p250) target = $region40
        $region39: #{tpu_custom_call.1} parent=35 // pred_region
          %253 = dma.done %s246, 128
        $region40: #{tpu_custom_call.1} parent=35 // pred_fallthru
          _
        %s254 = sand.u32 %s24, 1
        %s255 = scalar_lea.sflag [#allocation8], %s254
        %s256 = sand.u32 %s70, 1
        %s257 = smul.addr %s256, 128
        %s258 = scalar_lea.vmem [#allocation7], %s257
        // Predicated region
        $region41: #{tpu_custom_call.1} parent=35 // pred_check
          %p259 = pneg %p83
        $region42: #{tpu_custom_call.1} parent=35 // pred_check_branch
          %261 = sbr.rel (%p259) target = $region44
        $region43: #{tpu_custom_call.1} parent=35 // pred_region
          %262 = dma.done %s255, 2048
        $region44: #{tpu_custom_call.1} parent=35 // pred_fallthru
          _
        %s263 = sand.u32 %s24, 1
        %s264 = scalar_lea.sflag [#allocation8], %s263
        %s265 = sand.u32 %s96, 1
        %s266 = smul.addr %s265, 64
        %s267 = scalar_lea.vmem [#allocation9], %s266
        // Predicated region
        $region45: #{tpu_custom_call.1} parent=35 // pred_check
          %p268 = pneg %p109
        $region46: #{tpu_custom_call.1} parent=35 // pred_check_branch
          %270 = sbr.rel (%p268) target = $region48
        $region47: #{tpu_custom_call.1} parent=35 // pred_region
          %271 = dma.done %s264, 1024
        $region48: #{tpu_custom_call.1} parent=35 // pred_fallthru
          _
        %s272 = sand.u32 %s44, 1
        %s273 = scalar_lea.sflag [#allocation5], %s272
        %s274 = sand.u32 %s44, 1
        %s275 = smul.addr %s274, 8
        %s276 = scalar_lea.vmem [#allocation4], %s275
        %p277 = pneg %p57
        %p278 = pneg %p54
        %s279 = sand.u32 %s24, 1
        %s280 = scalar_lea.sflag [#allocation8], %s279
        %s281 = sand.u32 %s70, 1
        %s282 = smul.addr %s281, 128
        %s283 = scalar_lea.vmem [#allocation7], %s282
        %p284 = pneg %p83
        %p285 = pneg %p80
        %s286 = sand.u32 %s24, 1
        %s287 = scalar_lea.sflag [#allocation8], %s286
        %s288 = sand.u32 %s96, 1
        %s289 = smul.addr %s288, 64
        %s290 = scalar_lea.vmem [#allocation9], %s289
        %p291 = pneg %p109
        %p292 = pneg %p106
        %p293 = pneg %p130
        %p294 = pneg %p127
        %p295 = pneg %p156
        %p296 = pneg %p153
        %s297 = sand.u32 %s143, 1
        %s298 = scalar_lea.sflag [#allocation6], %s297
        %s299 = sand.u32 %s143, 1
        %s300 = smul.addr %s299, 8
        %s301 = scalar_lea.vmem [#allocation10], %s300
        %p303 = scmp.eq.s32.totalorder %s29, 0
        // Predicated region
        $region49: #{tpu_custom_call.1} parent=35 // pred_check
          %p304 = pneg %p303
        $region50: #{tpu_custom_call.1} parent=35 // pred_check_branch
          %306 = sbr.rel (%p304) target = $region52
        $region51: #{tpu_custom_call.1} parent=35 // pred_region
          %v307 = vld [vmem:[%s249] sm:$0xff]
          %v308 = vmul.f32 %v307, %v307
          %309 = vadd.xlane.f32.xlu0 %v308
          %v310 = vpop.xlane.xlu0 %309
          %v311 = vrcp.pop 128.0
          %v312 = vmul.f32 %v310, %v311
          %v313 = vadd.f32 %v312, 1e-05
          %v314 = vrsqrt.pop %v313
          %v315 = vmul.f32 %v307, %v314
          %v316 = vpack.c.bf16 %v315, %v315
          %317 = vst [vmem:[#allocation2] sm:$0xf] %v316
        $region52: #{tpu_custom_call.1} parent=35 // pred_fallthru
          _
        %v318 = vld [vmem:[#allocation2] sm:$0xf]
        %v319 = vld [vmem:[%s258] sm:$0xff]
        %v320 = vld [vmem:[%s258 + $0x8] sm:$0xff]
        %v321 = vld [vmem:[%s258 + $0x10] sm:$0xff]
        %v322 = vld [vmem:[%s258 + $0x18] sm:$0xff]
        %v323 = vld [vmem:[%s258 + $0x20] sm:$0xff]
        %v324 = vld [vmem:[%s258 + $0x28] sm:$0xff]
        %v325 = vld [vmem:[%s258 + $0x30] sm:$0xff]
        %v326 = vld [vmem:[%s258 + $0x38] sm:$0xff]
        %v327 = vld [vmem:[%s258 + $0x40] sm:$0xff]
        %v328 = vld [vmem:[%s258 + $0x48] sm:$0xff]
        %v329 = vld [vmem:[%s258 + $0x50] sm:$0xff]
        %v330 = vld [vmem:[%s258 + $0x58] sm:$0xff]
        %v331 = vld [vmem:[%s258 + $0x60] sm:$0xff]
        %v332 = vld [vmem:[%s258 + $0x68] sm:$0xff]
        %v333 = vld [vmem:[%s258 + $0x70] sm:$0xff]
        %v334 = vld [vmem:[%s258 + $0x78] sm:$0xff]
        %v351 = vunpack.c.l.b16 %v319
        %v352 = vunpack.c.h.b16 %v319
        %v353 = vunpack.c.l.b16 %v320
        %v354 = vunpack.c.h.b16 %v320
        %v355 = vunpack.c.l.b16 %v321
        %v356 = vunpack.c.h.b16 %v321
        %v357 = vunpack.c.l.b16 %v322
        %v358 = vunpack.c.h.b16 %v322
        %v359 = vunpack.c.l.b16 %v323
        %v360 = vunpack.c.h.b16 %v323
        %v361 = vunpack.c.l.b16 %v324
        %v362 = vunpack.c.h.b16 %v324
        %v363 = vunpack.c.l.b16 %v325
        %v364 = vunpack.c.h.b16 %v325
        %v365 = vunpack.c.l.b16 %v326
        %v366 = vunpack.c.h.b16 %v326
        %v367 = vunpack.c.l.b16 %v327
        %v368 = vunpack.c.h.b16 %v327
        %v369 = vunpack.c.l.b16 %v328
        %v370 = vunpack.c.h.b16 %v328
        %v371 = vunpack.c.l.b16 %v329
        %v372 = vunpack.c.h.b16 %v329
        %v373 = vunpack.c.l.b16 %v330
        %v374 = vunpack.c.h.b16 %v330
        %v375 = vunpack.c.l.b16 %v331
        %v376 = vunpack.c.h.b16 %v331
        %v377 = vunpack.c.l.b16 %v332
        %v378 = vunpack.c.h.b16 %v332
        %v379 = vunpack.c.l.b16 %v333
        %v380 = vunpack.c.h.b16 %v333
        %v381 = vunpack.c.l.b16 %v334
        %v382 = vunpack.c.h.b16 %v334
        %v383 = vpack.c.b16 %v353, %v351
        %v384 = vpack.c.b16 %v354, %v352
        %v385 = vpack.c.b16 %v357, %v355
        %v386 = vpack.c.b16 %v358, %v356
        %v387 = vpack.c.b16 %v361, %v359
        %v388 = vpack.c.b16 %v362, %v360
        %v389 = vpack.c.b16 %v365, %v363
        %v390 = vpack.c.b16 %v366, %v364
        %v391 = vpack.c.b16 %v369, %v367
        %v392 = vpack.c.b16 %v370, %v368
        %v393 = vpack.c.b16 %v373, %v371
        %v394 = vpack.c.b16 %v374, %v372
        %v395 = vpack.c.b16 %v377, %v375
        %v396 = vpack.c.b16 %v378, %v376
        %v397 = vpack.c.b16 %v381, %v379
        %v398 = vpack.c.b16 %v382, %v380
        %415 = vmatprep.subr.bf16.mxu0 %v384
        %416 = vmatpush1.bf16.msra.mxu0 %v383
        %417 = vmatprep.subr.bf16.mxu0 %v386
        %418 = vmatpush1.bf16.msra.mxu0 %v385
        %419 = vmatprep.subr.bf16.mxu0 %v388
        %420 = vmatpush1.bf16.msra.mxu0 %v387
        %421 = vmatprep.subr.bf16.mxu0 %v390
        %422 = vmatpush1.bf16.msra.mxu0 %v389
        %423 = vmatprep.subr.bf16.mxu0 %v392
        %424 = vmatpush1.bf16.msra.mxu0 %v391
        %425 = vmatprep.subr.bf16.mxu0 %v394
        %426 = vmatpush1.bf16.msra.mxu0 %v393
        %427 = vmatprep.subr.bf16.mxu0 %v396
        %428 = vmatpush1.bf16.msra.mxu0 %v395
        %429 = vmatprep.subr.bf16.mxu0 %v398
        %430 = vmatpush1.bf16.msra.mxu0 %v397
        %431 = vmatprep.subr.bf16.mxu0 0
        %432 = vmatpush1.bf16.msra.mxu0 0
        %433 = vmatprep.subr.bf16.mxu0 0
        %434 = vmatpush1.bf16.msra.mxu0 0
        %435 = vmatprep.subr.bf16.mxu0 0
        %436 = vmatpush1.bf16.msra.mxu0 0
        %437 = vmatprep.subr.bf16.mxu0 0
        %438 = vmatpush1.bf16.msra.mxu0 0
        %439 = vmatprep.subr.bf16.mxu0 0
        %440 = vmatpush1.bf16.msra.mxu0 0
        %441 = vmatprep.subr.bf16.mxu0 0
        %442 = vmatpush1.bf16.msra.mxu0 0
        %443 = vmatprep.subr.bf16.mxu0 0
        %444 = vmatpush1.bf16.msra.mxu0 0
        %445 = vmatprep.subr.bf16.mxu0 0
        %446 = vmatpush1.bf16.msra.mxu0 0
        %447 = vmatprep.mubr.bf16.mxu0 0
        %448 = vmatmul.mubr.bf16.gmra.mrb[0].mxu0 %v318
        %v449 = vpop.f32.mrb[0].mxu0
        %v450 = vadd.f32 0.0, %v449
        %v451 = vpop.f32.mrb[0].mxu0
        %v452 = vadd.f32 0.0, %v451
        %v453 = vpop.f32.mrb[0].mxu0
        %v454 = vpop.f32.mrb[0].mxu0
        %455 = vdwg.mxu0
        %v456 = vxor.u32 %v450, 2147483648
        %v457 = vmul.f32 %v456, 1.442695
        %v458 = vpow.pop %v457
        %v459 = vadd.f32 %v458, 1.0
        %v460 = vrcp.pop %v459
        %v461 = vmul.f32 1.0, %v460
        %v462 = vmul.f32 %v450, %v461
        %v463 = vmul.f32 %v462, %v452
        %v464 = vpack.c.bf16 %v463, %v463
        %v465 = vld [vmem:[%s267] sm:$0xf]
        %v466 = vld [vmem:[%s267 + $0x4] sm:$0xf]
        %v467 = vld [vmem:[%s267 + $0x8] sm:$0xf]
        %v468 = vld [vmem:[%s267 + $0xc] sm:$0xf]
        %v469 = vld [vmem:[%s267 + $0x10] sm:$0xf]
        %v470 = vld [vmem:[%s267 + $0x14] sm:$0xf]
        %v471 = vld [vmem:[%s267 + $0x18] sm:$0xf]
        %v472 = vld [vmem:[%s267 + $0x1c] sm:$0xf]
        %v473 = vld [vmem:[%s267 + $0x20] sm:$0xf]
        %v474 = vld [vmem:[%s267 + $0x24] sm:$0xf]
        %v475 = vld [vmem:[%s267 + $0x28] sm:$0xf]
        %v476 = vld [vmem:[%s267 + $0x2c] sm:$0xf]
        %v477 = vld [vmem:[%s267 + $0x30] sm:$0xf]
        %v478 = vld [vmem:[%s267 + $0x34] sm:$0xf]
        %v479 = vld [vmem:[%s267 + $0x38] sm:$0xf]
        %v480 = vld [vmem:[%s267 + $0x3c] sm:$0xf]
        %v497 = vunpack.c.l.b16 %v465
        %v498 = vunpack.c.l.b16 %v466
        %v499 = vunpack.c.l.b16 %v467
        %v500 = vunpack.c.l.b16 %v468
        %v501 = vunpack.c.l.b16 %v469
        %v502 = vunpack.c.l.b16 %v470
        %v503 = vunpack.c.l.b16 %v471
        %v504 = vunpack.c.l.b16 %v472
        %v505 = vunpack.c.l.b16 %v473
        %v506 = vunpack.c.l.b16 %v474
        %v507 = vunpack.c.l.b16 %v475
        %v508 = vunpack.c.l.b16 %v476
        %v509 = vunpack.c.l.b16 %v477
        %v510 = vunpack.c.l.b16 %v478
        %v511 = vunpack.c.l.b16 %v479
        %v512 = vunpack.c.l.b16 %v480
        %v513 = vpack.c.b16 %v498, %v497
        %v514 = vpack.c.b16 %v500, %v499
        %v515 = vpack.c.b16 %v502, %v501
        %v516 = vpack.c.b16 %v504, %v503
        %v517 = vpack.c.b16 %v506, %v505
        %v518 = vpack.c.b16 %v508, %v507
        %v519 = vpack.c.b16 %v510, %v509
        %v520 = vpack.c.b16 %v512, %v511
        %529 = vmatprep.subr.bf16.mxu0 0
        %530 = vmatpush1.bf16.msra.mxu0 %v513
        %531 = vmatprep.subr.bf16.mxu0 0
        %532 = vmatpush1.bf16.msra.mxu0 %v514
        %533 = vmatprep.subr.bf16.mxu0 0
        %534 = vmatpush1.bf16.msra.mxu0 %v515
        %535 = vmatprep.subr.bf16.mxu0 0
        %536 = vmatpush1.bf16.msra.mxu0 %v516
        %537 = vmatprep.subr.bf16.mxu0 0
        %538 = vmatpush1.bf16.msra.mxu0 %v517
        %539 = vmatprep.subr.bf16.mxu0 0
        %540 = vmatpush1.bf16.msra.mxu0 %v518
        %541 = vmatprep.subr.bf16.mxu0 0
        %542 = vmatpush1.bf16.msra.mxu0 %v519
        %543 = vmatprep.subr.bf16.mxu0 0
        %544 = vmatpush1.bf16.msra.mxu0 %v520
        %545 = vmatprep.subr.bf16.mxu0 0
        %546 = vmatpush1.bf16.msra.mxu0 0
        %547 = vmatprep.subr.bf16.mxu0 0
        %548 = vmatpush1.bf16.msra.mxu0 0
        %549 = vmatprep.subr.bf16.mxu0 0
        %550 = vmatpush1.bf16.msra.mxu0 0
        %551 = vmatprep.subr.bf16.mxu0 0
        %552 = vmatpush1.bf16.msra.mxu0 0
        %553 = vmatprep.subr.bf16.mxu0 0
        %554 = vmatpush1.bf16.msra.mxu0 0
        %555 = vmatprep.subr.bf16.mxu0 0
        %556 = vmatpush1.bf16.msra.mxu0 0
        %557 = vmatprep.subr.bf16.mxu0 0
        %558 = vmatpush1.bf16.msra.mxu0 0
        %559 = vmatprep.subr.bf16.mxu0 0
        %560 = vmatpush1.bf16.msra.mxu0 0
        %561 = vmatprep.mubr.bf16.mxu0 0
        %562 = vmatmul.mubr.bf16.gmra.mrb[0].mxu0 %v464
        %v563 = vpop.f32.mrb[0].mxu0
        %v564 = vadd.f32 0.0, %v563
        %v565 = vpop.f32.mrb[0].mxu0
        %v566 = vpop.f32.mrb[0].mxu0
        %v567 = vpop.f32.mrb[0].mxu0
        %568 = vdwg.mxu0
        // Predicated region
        $region53: #{tpu_custom_call.1} parent=35 // pred_check
          %p569 = pneg %p303
        $region54: #{tpu_custom_call.1} parent=35 // pred_check_branch
          %571 = sbr.rel (%p569) target = $region56
        $region55: #{tpu_custom_call.1} parent=35 // pred_region
          %572 = vst [vmem:[#allocation3] sm:$0xff] %v564
        $region56: #{tpu_custom_call.1} parent=35 // pred_fallthru
          _
        %p573 = scmp.gt.s32.totalorder %s29, 0
        // Predicated region
        $region57: #{tpu_custom_call.1} parent=35 // pred_check
          %p574 = pneg %p573
        $region58: #{tpu_custom_call.1} parent=35 // pred_check_branch
          %576 = sbr.rel (%p574) target = $region60
        $region59: #{tpu_custom_call.1} parent=35 // pred_region
          %v577 = vld [vmem:[#allocation3] sm:$0xff]
          %v578 = vadd.f32 %v577, %v564
          %579 = vst [vmem:[#allocation3] sm:$0xff] %v578
        $region60: #{tpu_custom_call.1} parent=35 // pred_fallthru
          _
        %p580 = scmp.eq.s32.totalorder %s29, 1
        // Predicated region
        $region61: #{tpu_custom_call.1} parent=35 // pred_check
          %p581 = pneg %p580
        $region62: #{tpu_custom_call.1} parent=35 // pred_check_branch
          %583 = sbr.rel (%p581) target = $region64
        $region63: #{tpu_custom_call.1} parent=35 // pred_region
          %v584 = vld [vmem:[%s249] sm:$0xff]
          %v585 = vld [vmem:[#allocation3] sm:$0xff]
          %v586 = vadd.f32 %v584, %v585
          %v587 = vmul.f32 %v586, %v586
          %588 = vadd.xlane.f32.xlu0 %v587
          %v589 = vpop.xlane.xlu0 %588
          %v590 = vrcp.pop 128.0
          %v591 = vmul.f32 %v589, %v590
          %v592 = vadd.f32 %v591, 1e-05
          %v593 = vrsqrt.pop %v592
          %v594 = vmul.f32 %v586, %v593
          %v595 = vld [vmem:[%s3] sm:$0x1]
          %v597 = vlaneseq
          %v598 = vshrl.u32 %v597, 7
          %v599 = vsub.s32 0, %v598
          %v600 = vrot.slane %v595, %v599
          %v602 = vmul.f32 %v594, %v600
          %603 = vst [vmem:[%s301] sm:$0xff] %v602
        $region64: #{tpu_custom_call.1} parent=35 // pred_fallthru
          _
        %s604 = sand.u32 %s143, 1
        %s605 = scalar_lea.sflag [#allocation6], %s604
        %s606 = sand.u32 %s143, 1
        %s607 = smul.addr %s606, 8
        %s608 = scalar_lea.vmem [#allocation10], %s607
        // Predicated region
        $region65: #{tpu_custom_call.1} parent=35 // pred_check
          %p609 = pneg %p153
        $region66: #{tpu_custom_call.1} parent=35 // pred_check_branch
          %611 = sbr.rel (%p609) target = $region68
        $region67: #{tpu_custom_call.1} parent=35 // pred_region
          %s613 = ssub.s32 128, 128
          %614 = vsyncadd %s605, %s613
          %s615 = smul.addr %s28, 128
          %s616 = scalar_lea.hbm %s4, %s615
          %s618 = sshll.u32 %s608, 4
          %s619 = int_to_ptr.vmem [resolvable:$true] %s618
          %621 = dma.vmem_to_hbm [thread:$0]  %s619, 128, %s616, %s605
        $region68: #{tpu_custom_call.1} parent=35 // pred_fallthru
          _
      $region36: #{tpu_custom_call.1} parent=5 // pred_fallthru
        _
      %p622 = scmp.le.s32.totalorder 2, %s19
      // Predicated region
      $region69: #{tpu_custom_call.1} parent=5 // pred_check
        %p623 = pneg %p622
      $region70: #{tpu_custom_call.1} parent=5 // pred_check_branch
        %625 = sbr.rel (%p623) target = $region72
      $region71: #{tpu_custom_call.1} parent=5 // pred_region
        %s626 = ssub.s32 %s19, 2
        // Predicated region
        $region73: #{tpu_custom_call.1} parent=71 // pred_check
          %p627 = pneg %p159
        $region74: #{tpu_custom_call.1} parent=71 // pred_check_branch
          %629 = sbr.rel (%p627) target = $region76
        $region75: #{tpu_custom_call.1} parent=71 // pred_region
          %s630 = sand.u32 %s144, 1
          %s631 = scalar_lea.sflag [#allocation6], %s630
          %s632 = sand.u32 %s144, 1
          %s633 = smul.addr %s632, 8
          %s634 = scalar_lea.vmem [#allocation10], %s633
          %635 = dma.done %s631, 128
        $region76: #{tpu_custom_call.1} parent=71 // pred_fallthru
          _
      $region72: #{tpu_custom_call.1} parent=5 // pred_fallthru
        _
    $region6: #{tpu_custom_call.1} parent=1 // loop_footer
      %s23 = sadd.s32 1, %s19
    $region7: #{tpu_custom_call.1} parent=1 // loop_footer_branch
      %18 = sbr.rel target = $region3
    $region8: #{tpu_custom_call.1} parent=1 // loop_exit
      _
    %636 = vsyncpa [#allocation5], 1
    %s637 = scalar_lea.sflag [#allocation5], 1
    %638 = vsyncpa %s637, 1
    %639 = vsyncpa [#allocation8], 1
    %s640 = scalar_lea.sflag [#allocation8], 1
    %641 = vsyncpa %s640, 1
    %642 = vsyncpa [#allocation6], 1
    %s643 = scalar_lea.sflag [#allocation6], 1
    %644 = vsyncpa %s643, 1

</llo_original>
